<compile_context>
chip_gen: v6e
topology: v6e:2x2x1
jax: 0.10.0
libtpu: 0.0.40
codegen_flags: <defaults>
</compile_context>

<pallas_src>
import functools

import jax
import jax.numpy as jnp
from jax.experimental import pallas as pl
from jax.experimental.pallas import tpu as pltpu


def _round_up(x, m):
    return ((x + m - 1) // m) * m


def _cdiv(a, b):
    return -(-a // b)


def _vmem_capacity_bytes():
    """Physical VMEM of the local TPU; conservative 64 MiB (v7x) fallback."""
    try:
        return int(pltpu.get_tpu_info().vmem_capacity_bytes)
    except Exception:
        return 64 << 20


def _footprint_bytes(tm, th, d_pad, cbytes, obytes, use_scratch):
    """Estimated VMEM for double-buffered blocks + accumulator scratch."""
    f = 2 * tm * d_pad * cbytes        # x tiles (in)
    f += 2 * tm * d_pad * obytes       # output tiles
    f += 2 * d_pad * th * cbytes       # W1 slices
    f += 2 * th * d_pad * cbytes       # W2 slices
    f += 2 * 8 * th * 4                # b1 (sublane-padded to 8)
    f += 2 * 8 * d_pad * 4             # b2
    if use_scratch:
        f += tm * d_pad * 4            # f32 accumulator scratch
    return f


# ---------------------------------------------------------------------------
# Kernels
# ---------------------------------------------------------------------------
def _ffn_kernel_scratch(x_ref, w1_ref, b1_ref, w2_ref, b2_ref, o_ref, acc_ref):
    # Grid = (token tiles [parallel], hidden tiles [arbitrary/reduction]).
    # The output block index is constant across the hidden axis, so acc_ref
    # carries partial sums and o_ref is written only on the last hidden step.
    h_idx = pl.program_id(1)

    @pl.when(h_idx == 0)
    def _():
        acc_ref[...] = jnp.zeros_like(acc_ref)

    h = jnp.dot(x_ref[...], w1_ref[...], preferred_element_type=jnp.float32)
    h = jnp.maximum(h + b1_ref[...], 0.0)            # f32 bias + ReLU on the VPU
    acc_ref[...] += jnp.dot(h.astype(w2_ref.dtype), w2_ref[...],
                            preferred_element_type=jnp.float32)

    @pl.when(h_idx == pl.num_programs(1) - 1)
    def _():
        o_ref[...] = (acc_ref[...] + b2_ref[...]).astype(o_ref.dtype)


def _ffn_kernel_out_acc(x_ref, w1_ref, b1_ref, w2_ref, b2_ref, o_ref):
    # f32 output: accumulate directly into the (VMEM-resident) output block;
    # no separate scratch -> less VMEM (helps v7x's 64 MiB).
    h_idx = pl.program_id(1)

    @pl.when(h_idx == 0)
    def _():
        o_ref[...] = jnp.broadcast_to(b2_ref[...], o_ref.shape)

    h = jnp.dot(x_ref[...], w1_ref[...], preferred_element_type=jnp.float32)
    h = jnp.maximum(h + b1_ref[...], 0.0)
    o_ref[...] += jnp.dot(h.astype(w2_ref.dtype), w2_ref[...],
                          preferred_element_type=jnp.float32)


# ---------------------------------------------------------------------------
# Parameter prep (run ONCE, outside the per-call hot path)
# ---------------------------------------------------------------------------
def prepare_ffn_params(w1, b1, w2, b2, compute_dtype=jnp.bfloat16):
    """Pad weights/biases to 128-lane aligned shapes and cast matmul weights
    to the MXU compute dtype (bf16 by default). Zero padding is exact:
    padded hidden units yield relu(0+0)=0 and hit zero W2 rows; padded
    feature columns are sliced off by the wrapper."""
    d_model, hidden = w1.shape
    d_pad = _round_up(d_model, 128)
    h_pad = _round_up(hidden, 128)
    w1_p = jnp.pad(w1, ((0, d_pad - d_model), (0, h_pad - hidden))).astype(compute_dtype)
    w2_p = jnp.pad(w2, ((0, h_pad - hidden), (0, d_pad - d_model))).astype(compute_dtype)
    b1_p = jnp.pad(b1.reshape(1, hidden), ((0, 0), (0, h_pad - hidden))).astype(jnp.float32)
    b2_p = jnp.pad(b2.reshape(1, d_model), ((0, 0), (0, d_pad - d_model))).astype(jnp.float32)
    return w1_p, b1_p, w2_p, b2_p


# ---------------------------------------------------------------------------
# Forward pass
# ---------------------------------------------------------------------------
@functools.partial(jax.jit, static_argnames=("tile_m", "tile_h"))
def feed_forward(x, w1_p, b1_p, w2_p, b2_p, *, tile_m=512, tile_h=None):
    """y = relu(x @ W1 + b1) @ W2 + b2 with padded/cast params from
    prepare_ffn_params. x: (..., d_model) -> (..., d_model)."""
    out_dtype = x.dtype
    compute_dtype = w1_p.dtype
    d_model = x.shape[-1]
    d_pad, h_pad = w1_p.shape
    assert d_pad % 128 == 0 and h_pad % 128 == 0 and d_pad >= d_model
    assert w2_p.shape == (h_pad, d_pad)
    assert b1_p.shape == (1, h_pad) and b2_p.shape == (1, d_pad)

    orig_shape = x.shape
    x2 = x.reshape(-1, d_model)
    m = x2.shape[0]

    cbytes = jnp.dtype(compute_dtype).itemsize
    obytes = jnp.dtype(out_dtype).itemsize
    # dtype-aware sublane packing: bf16 packs 16 rows / int8 32 rows per tile.
    row_align = {1: 32, 2: 16, 4: 8}.get(cbytes, 8)

    # Token tile: large by default; at small M split into >=2 tiles so the
    # "parallel" axis can span both TensorCores on v7x.
    if m <= tile_m:
        tm = max(row_align, _round_up(_cdiv(m, 2), row_align))
    else:
        tm = _round_up(tile_m, row_align)
    tm = min(tm, _round_up(m, row_align))

    use_out_acc = (out_dtype == jnp.float32)

    # VMEM-aware hidden-tile selection: prefer fully resident weights
    # (th == h_pad -> W1/W2 DMA'd exactly once for the whole kernel).
    cap = _vmem_capacity_bytes()
    budget = max(16 << 20, int(cap * 0.7))
    th_cands = [h_pad] + [t for t in (8192, 4096, 2048, 1024, 512, 256, 128)
                          if t < h_pad and h_pad % t == 0]
    if tile_h is not None:
        cap_th = _round_up(tile_h, 128)
        th_cands = [t for t in th_cands if t <= cap_th] or [128]

    tm_sel = th_sel = fp = None
    tmc = tm
    while True:
        for th in th_cands:
            f = _footprint_bytes(tmc, th, d_pad, cbytes, obytes, not use_out_acc)
            if f <= budget:
                tm_sel, th_sel, fp = tmc, th, f
                break
        if tm_sel is not None or tmc <= row_align:
            break
        tmc = max(row_align, _round_up(tmc // 2, row_align))
    if tm_sel is None:  # smallest config anyway; let the compiler decide.
        tm_sel, th_sel = tmc, th_cands[-1]
        fp = _footprint_bytes(tm_sel, th_sel, d_pad, cbytes, obytes, not use_out_acc)
    tm, th = tm_sel, th_sel

    m_pad = _round_up(m, tm)
    grid = (m_pad // tm, h_pad // th)  # (token [parallel], hidden [reduction])

    # Only x is padded/cast per call (weights were prepared once).
    if x2.dtype != compute_dtype:
        x2 = x2.astype(compute_dtype)
    if m_pad != m or d_pad != d_model:
        x2 = jnp.pad(x2, ((0, m_pad - m), (0, d_pad - d_model)))

    # Explicit scoped-VMEM limit derived from the actual block sizes
    # (+25% / +2 MiB headroom), never below the 32 MiB default, capped near
    # physical VMEM.
    vmem_limit = min(max(cap - (4 << 20), 16 << 20),
                     max(32 << 20, int(fp * 1.25) + (2 << 20)))

    kernel = _ffn_kernel_out_acc if use_out_acc else _ffn_kernel_scratch
    scratch = [] if use_out_acc else [pltpu.VMEM((tm, d_pad), jnp.float32)]

    out = pl.pallas_call(
        kernel,
        out_shape=jax.ShapeDtypeStruct((m_pad, d_pad), out_dtype),
        grid=grid,
        in_specs=[
            pl.BlockSpec((tm, d_pad), lambda i, h: (i, 0)),   # x token tile
            pl.BlockSpec((d_pad, th), lambda i, h: (0, h)),   # W1 hidden slice
            pl.BlockSpec((1, th), lambda i, h: (0, h)),       # b1 hidden slice
            pl.BlockSpec((th, d_pad), lambda i, h: (h, 0)),   # W2 hidden slice
            pl.BlockSpec((1, d_pad), lambda i, h: (0, 0)),    # b2
        ],
        out_specs=pl.BlockSpec((tm, d_pad), lambda i, h: (i, 0)),
        scratch_shapes=scratch,
        compiler_params=pltpu.CompilerParams(
            dimension_semantics=("parallel", "arbitrary"),
            vmem_limit_bytes=vmem_limit),
    )(x2, w1_p, b1_p, w2_p, b2_p)

    out = out[:m, :d_model]
    return out.reshape(orig_shape)


def init_params(key, d_model):
    """Deterministic init matching nn.Linear's U(-1/sqrt(fan_in), 1/sqrt(fan_in))."""
    hidden = d_model * 4
    k1, k2, k3, k4 = jax.random.split(key, 4)
    bound1 = 1.0 / (d_model ** 0.5)
    bound2 = 1.0 / (hidden ** 0.5)
    # PyTorch stores Linear weight as (out, in) and computes x @ W.T;
    # here the weights are stored already transposed as (in, out).
    w1 = jax.random.uniform(k1, (d_model, hidden), jnp.float32, -bound1, bound1)
    b1 = jax.random.uniform(k2, (hidden,), jnp.float32, -bound1, bound1)
    w2 = jax.random.uniform(k3, (hidden, d_model), jnp.float32, -bound2, bound2)
    b2 = jax.random.uniform(k4, (d_model,), jnp.float32, -bound2, bound2)
    return w1, b1, w2, b2


if __name__ == "__main__":
    d_model = 32
    batch, seq = 2, 8

    key = jax.random.PRNGKey(0)
    kx, kp = jax.random.split(key)
    x = jax.random.normal(kx, (batch, seq, d_model), jnp.float32)
    w1, b1, w2, b2 = init_params(kp, d_model)

    # Pad + bf16-cast weights once (hoisted out of the per-call path).
    params = prepare_ffn_params(w1, b1, w2, b2, compute_dtype=jnp.bfloat16)

    y = feed_forward(x, *params)
    y = jax.block_until_ready(y)

    # Reference with the same bf16-MXU / f32-accumulate numerics.
    bf16 = jnp.bfloat16
    h_ref = jnp.maximum(
        jnp.dot(x.astype(bf16), w1.astype(bf16),
                preferred_element_type=jnp.float32) + b1, 0.0)
    ref = jnp.dot(h_ref.astype(bf16), w2.astype(bf16),
                  preferred_element_type=jnp.float32) + b2

    assert y.shape == x.shape
    err = float(jnp.max(jnp.abs(y - ref)))
    assert err < 2e-3, err

    print("KERNEL_OK")
</pallas_src>

<mosaic_0001>
module attributes {stable_mosaic.version = 11 : i64} {
  func.func @_ffn_kernel_out_acc(%arg0: i32, %arg1: i32, %arg2: memref<16x128xbf16, #tpu.memory_space<vmem>>, %arg3: memref<128x128xbf16, #tpu.memory_space<vmem>>, %arg4: memref<1x128xf32, #tpu.memory_space<vmem>>, %arg5: memref<128x128xbf16, #tpu.memory_space<vmem>>, %arg6: memref<1x128xf32, #tpu.memory_space<vmem>>, %arg7: memref<16x128xf32, #tpu.memory_space<vmem>>) attributes {dimension_semantics = [#tpu.dimension_semantics<parallel>, #tpu.dimension_semantics<arbitrary>], iteration_bounds = array<i64: 1, 1>, scalar_prefetch = 0 : i64, scratch_operands = 0 : i64, tpu.core_type = #tpu.core_type<tc>, window_params = [{transform_indices = @transform_0, window_bounds = array<i64: 16, 128>}, {transform_indices = @transform_1, window_bounds = array<i64: 128, 128>}, {transform_indices = @transform_2, window_bounds = array<i64: 1, 128>}, {transform_indices = @transform_3, window_bounds = array<i64: 128, 128>}, {pipeline_mode = #tpu.pipeline_mode<synchronous>, transform_indices = @transform_4, window_bounds = array<i64: 1, 128>}, {transform_indices = @transform_5, window_bounds = array<i64: 16, 128>}]} {
    %c0_i32 = arith.constant 0 : i32
    %0 = arith.cmpi eq, %arg1, %c0_i32 : i32
    %1 = arith.extui %0 : i1 to i32
    %c0_i32_0 = arith.constant 0 : i32
    %2 = arith.cmpi ne, %1, %c0_i32_0 : i32
    scf.if %2 {
      %c0_14 = arith.constant 0 : index
      %c0_15 = arith.constant 0 : index
      %17 = vector.load %arg6[%c0_14, %c0_15] : memref<1x128xf32, #tpu.memory_space<vmem>>, vector<1x128xf32>
      %18 = vector.shape_cast %17 : vector<1x128xf32> to vector<1x128xf32>
      %19 = vector.broadcast %18 : vector<1x128xf32> to vector<16x128xf32>
      %c0_16 = arith.constant 0 : index
      %c0_17 = arith.constant 0 : index
      %20 = vector.load %arg7[%c0_16, %c0_17] : memref<16x128xf32, #tpu.memory_space<vmem>>, vector<16x128xf32>
      tpu.vector_store %arg7[%c0_16, %c0_17], %19 {strides = array<i32>} : memref<16x128xf32, #tpu.memory_space<vmem>>, vector<16x128xf32>,
    } else {
    }
    %c0 = arith.constant 0 : index
    %c0_1 = arith.constant 0 : index
    %3 = vector.load %arg2[%c0, %c0_1] : memref<16x128xbf16, #tpu.memory_space<vmem>>, vector<16x128xbf16>
    %c0_2 = arith.constant 0 : index
    %c0_3 = arith.constant 0 : index
    %4 = vector.load %arg3[%c0_2, %c0_3] : memref<128x128xbf16, #tpu.memory_space<vmem>>, vector<128x128xbf16>
    %cst = arith.constant dense<0.000000e+00> : vector<16x128xf32>
    %5 = tpu.matmul %3, %4, %cst {dimension_numbers = #tpu.dot_dimension_numbers<[1], [0], [0], [1], [0, 0, 1, 1], [], []>} : vector<16x128xbf16>, vector<128x128xbf16>, vector<16x128xf32> -> vector<16x128xf32>
    %c0_4 = arith.constant 0 : index
    %c0_5 = arith.constant 0 : index
    %6 = vector.load %arg4[%c0_4, %c0_5] : memref<1x128xf32, #tpu.memory_space<vmem>>, vector<1x128xf32>
    %7 = vector.broadcast %6 : vector<1x128xf32> to vector<16x128xf32>
    %8 = arith.addf %5, %7 : vector<16x128xf32>
    %cst_6 = arith.constant 0.000000e+00 : f32
    %9 = vector.broadcast %cst_6 : f32 to vector<16x128xf32>
    %10 = arith.maximumf %8, %9 : vector<16x128xf32>
    %c0_7 = arith.constant 0 : index
    %c0_8 = arith.constant 0 : index
    %11 = vector.load %arg7[%c0_7, %c0_8] : memref<16x128xf32, #tpu.memory_space<vmem>>, vector<16x128xf32>
    %12 = arith.truncf %10 : vector<16x128xf32> to vector<16x128xbf16>
    %c0_9 = arith.constant 0 : index
    %c0_10 = arith.constant 0 : index
    %13 = vector.load %arg5[%c0_9, %c0_10] : memref<128x128xbf16, #tpu.memory_space<vmem>>, vector<128x128xbf16>
    %cst_11 = arith.constant dense<0.000000e+00> : vector<16x128xf32>
    %14 = tpu.matmul %12, %13, %cst_11 {dimension_numbers = #tpu.dot_dimension_numbers<[1], [0], [0], [1], [0, 0, 1, 1], [], []>} : vector<16x128xbf16>, vector<128x128xbf16>, vector<16x128xf32> -> vector<16x128xf32>
    %15 = arith.addf %11, %14 : vector<16x128xf32>
    %c0_12 = arith.constant 0 : index
    %c0_13 = arith.constant 0 : index
    %16 = vector.load %arg7[%c0_12, %c0_13] : memref<16x128xf32, #tpu.memory_space<vmem>>, vector<16x128xf32>
    tpu.vector_store %arg7[%c0_12, %c0_13], %15 {strides = array<i32>} : memref<16x128xf32, #tpu.memory_space<vmem>>, vector<16x128xf32>,
    return
  }
  func.func @transform_0(%arg0: i32, %arg1: i32) -> (i32, i32) {
    %c0_i32 = arith.constant 0 : i32
    %c0_i32_0 = arith.constant 0 : i32
    return %arg0, %c0_i32 : i32, i32
  }
  func.func @transform_1(%arg0: i32, %arg1: i32) -> (i32, i32) {
    %c0_i32 = arith.constant 0 : i32
    %c0_i32_0 = arith.constant 0 : i32
    return %c0_i32, %arg1 : i32, i32
  }
  func.func @transform_2(%arg0: i32, %arg1: i32) -> (i32, i32) {
    %c0_i32 = arith.constant 0 : i32
    %c0_i32_0 = arith.constant 0 : i32
    return %c0_i32, %arg1 : i32, i32
  }
  func.func @transform_3(%arg0: i32, %arg1: i32) -> (i32, i32) {
    %c0_i32 = arith.constant 0 : i32
    %c0_i32_0 = arith.constant 0 : i32
    return %arg1, %c0_i32 : i32, i32
  }
  func.func @transform_4(%arg0: i32, %arg1: i32) -> (i32, i32) {
    %c0_i32 = arith.constant 0 : i32
    %c0_i32_0 = arith.constant 0 : i32
    %c0_i32_1 = arith.constant 0 : i32
    return %c0_i32, %c0_i32_0 : i32, i32
  }
  func.func @transform_5(%arg0: i32, %arg1: i32) -> (i32, i32) {
    %c0_i32 = arith.constant 0 : i32
    %c0_i32_0 = arith.constant 0 : i32
    return %arg0, %c0_i32 : i32, i32
  }
}

</mosaic_0001>

<llo_original>
// kernel: feed_forward.1
$region0: #{feed_forward.1}
  #allocation0 [shape = 'u32[]', space=smem, size = 0x4, offset = 0x4, fixed_abs, tag = 'smem constant byte address 0x4 - core index']
  #allocation1 [shape = 'u32[144,128]{1,0:T(1,128)}', space=vmem, size = 0x12000, scoped, tag = 'internal scratch']
  %s0 = inlined_call_operand.vmem [shape: bf16[16,128], index: 0, kind: input, shape index: {}]
  %s1 = inlined_call_operand.hbm [shape: bf16[128,128], index: 1, kind: input, shape index: {}]
  %s2 = inlined_call_operand.vmem [shape: f32[1,128], index: 2, kind: input, shape index: {}]
  %s3 = inlined_call_operand.hbm [shape: bf16[128,128], index: 3, kind: input, shape index: {}]
  %s4 = inlined_call_operand.vmem [shape: f32[1,128], index: 4, kind: input, shape index: {}]
  %s5 = inlined_call_operand.vmem [shape: f32[16,128], index: 5, kind: output, shape index: {}]
  %s6 = sld [smem:[#allocation0]]
  $region42: #{feed_forward.1} parent=0
    _
  %s8 = ssub.s32 1, %s6
  %s9 = scalar_select 0, %s8, %s6
  $region1: #{feed_forward.1} parent=0
    #allocation2 [shape = 'u8[32768]{0}', space=vmem, size = 0x8000, scoped, tag = 'input window, operand 1, single buffered']
    #allocation3 [shape = 's32[1]{0}', space=sflag, size = 0x4, scoped, tag = 'scoped memory for feed_forward.1']
    #allocation4 [shape = 'u8[32768]{0}', space=vmem, size = 0x8000, scoped, tag = 'input window, operand 3, single buffered']
    #allocation5 [shape = 's32[1]{0}', space=sflag, size = 0x4, scoped, tag = 'scoped memory for feed_forward.1']
    %10 = vsyncpa [#allocation3], 0
    %11 = vsyncpa [#allocation5], 0
    // Predicated region
    $region2: #{feed_forward.1} parent=1 // pred_check
      _
    $region3: #{feed_forward.1} parent=1 // pred_check_branch
      %13 = sbr.rel (0) target = $region5
    $region4: #{feed_forward.1} parent=1 // pred_region
      _
    $region5: #{feed_forward.1} parent=1 // pred_fallthru
      _
    // Predicated region
    $region6: #{feed_forward.1} parent=1 // pred_check
      _
    $region7: #{feed_forward.1} parent=1 // pred_check_branch
      %15 = sbr.rel (0) target = $region9
    $region8: #{feed_forward.1} parent=1 // pred_region
      %s17 = ssub.s32 1024, 1024
      %18 = vsyncadd [#allocation3], %s17
      %s19 = sshll.u32 [#allocation2], 4
      %s20 = int_to_ptr.vmem [resolvable:$true] %s19
      %25 = dma.hbm_to_vmem [thread:$0]  %s1, 1024, %s20, [#allocation3], 64, 64, 4
    $region9: #{feed_forward.1} parent=1 // pred_fallthru
      _
    // Predicated region
    $region10: #{feed_forward.1} parent=1 // pred_check
      _
    $region11: #{feed_forward.1} parent=1 // pred_check_branch
      %27 = sbr.rel (0) target = $region13
    $region12: #{feed_forward.1} parent=1 // pred_region
      _
    $region13: #{feed_forward.1} parent=1 // pred_fallthru
      _
    // Predicated region
    $region14: #{feed_forward.1} parent=1 // pred_check
      _
    $region15: #{feed_forward.1} parent=1 // pred_check_branch
      %29 = sbr.rel (0) target = $region17
    $region16: #{feed_forward.1} parent=1 // pred_region
      %s31 = ssub.s32 1024, 1024
      %32 = vsyncadd [#allocation5], %s31
      %s33 = sshll.u32 [#allocation4], 4
      %s34 = int_to_ptr.vmem [resolvable:$true] %s33
      %39 = dma.hbm_to_vmem [thread:$0]  %s3, 1024, %s34, [#allocation5], 64, 64, 4
    $region17: #{feed_forward.1} parent=1 // pred_fallthru
      _
    // Predicated region
    $region18: #{feed_forward.1} parent=1 // pred_check
      _
    $region19: #{feed_forward.1} parent=1 // pred_check_branch
      %41 = sbr.rel (0) target = $region21
    $region20: #{feed_forward.1} parent=1 // pred_region
      _
    $region21: #{feed_forward.1} parent=1 // pred_fallthru
      _
    // Predicated region
    $region22: #{feed_forward.1} parent=1 // pred_check
      _
    $region23: #{feed_forward.1} parent=1 // pred_check_branch
      %43 = sbr.rel (0) target = $region25
    $region24: #{feed_forward.1} parent=1 // pred_region
      %44 = dma.done [#allocation3], 1024
    $region25: #{feed_forward.1} parent=1 // pred_fallthru
      _
    // Predicated region
    $region26: #{feed_forward.1} parent=1 // pred_check
      _
    $region27: #{feed_forward.1} parent=1 // pred_check_branch
      %46 = sbr.rel (0) target = $region29
    $region28: #{feed_forward.1} parent=1 // pred_region
      %47 = dma.done [#allocation5], 1024
    $region29: #{feed_forward.1} parent=1 // pred_fallthru
      _
    %p49 = scmp.eq.s32.totalorder 0, 0
    // Predicated region
    $region30: #{feed_forward.1} parent=1 // pred_check
      %p50 = pneg %p49
    $region31: #{feed_forward.1} parent=1 // pred_check_branch
      %52 = sbr.rel (%p50) target = $region33
    $region32: #{feed_forward.1} parent=1 // pred_region
      %v53 = vld [vmem:[%s4] sm:$0x1]
      %v55 = vlaneseq
      %v56 = vshrl.u32 %v55, 7
      %v57 = vsub.s32 0, %v56
      %v58 = vrot.slane %v53, %v57
      %60 = vst [vmem:[%s5] sm:$0xff] %v58
      %61 = vst [vmem:[%s5 + $0x8] sm:$0xff] %v58
    $region33: #{feed_forward.1} parent=1 // pred_fallthru
      _
    %v62 = vld [vmem:[%s0] sm:$0xf]
    %v63 = vld [vmem:[%s0 + $0x4] sm:$0xf]
    %v64 = vld [vmem:[#allocation2] sm:$0xf]
    %v65 = vld [vmem:[#allocation2 + $0x4] sm:$0xf]
    %v66 = vld [vmem:[#allocation2 + $0x8] sm:$0xf]
    %v67 = vld [vmem:[#allocation2 + $0xc] sm:$0xf]
    %v68 = vld [vmem:[#allocation2 + $0x10] sm:$0xf]
    %v69 = vld [vmem:[#allocation2 + $0x14] sm:$0xf]
    %v70 = vld [vmem:[#allocation2 + $0x18] sm:$0xf]
    %v71 = vld [vmem:[#allocation2 + $0x1c] sm:$0xf]
    %v72 = vld [vmem:[#allocation2 + $0x20] sm:$0xf]
    %v73 = vld [vmem:[#allocation2 + $0x24] sm:$0xf]
    %v74 = vld [vmem:[#allocation2 + $0x28] sm:$0xf]
    %v75 = vld [vmem:[#allocation2 + $0x2c] sm:$0xf]
    %v76 = vld [vmem:[#allocation2 + $0x30] sm:$0xf]
    %v77 = vld [vmem:[#allocation2 + $0x34] sm:$0xf]
    %v78 = vld [vmem:[#allocation2 + $0x38] sm:$0xf]
    %v79 = vld [vmem:[#allocation2 + $0x3c] sm:$0xf]
    %v80 = vld [vmem:[%s2] sm:$0x1]
    %v82 = vlaneseq
    %v83 = vshrl.u32 %v82, 7
    %v84 = vsub.s32 0, %v83
    %v85 = vrot.slane %v80, %v84
    %v89 = vunpack.c.l.b16 %v62
    %v90 = vunpack.c.l.b16 %v63
    %v91 = vpack.c.b16 %v90, %v89
    %v109 = vunpack.c.l.b16 %v64
    %v110 = vunpack.c.l.b16 %v65
    %v111 = vunpack.c.l.b16 %v66
    %v112 = vunpack.c.l.b16 %v67
    %v113 = vunpack.c.l.b16 %v68
    %v114 = vunpack.c.l.b16 %v69
    %v115 = vunpack.c.l.b16 %v70
    %v116 = vunpack.c.l.b16 %v71
    %v117 = vunpack.c.l.b16 %v72
    %v118 = vunpack.c.l.b16 %v73
    %v119 = vunpack.c.l.b16 %v74
    %v120 = vunpack.c.l.b16 %v75
    %v121 = vunpack.c.l.b16 %v76
    %v122 = vunpack.c.l.b16 %v77
    %v123 = vunpack.c.l.b16 %v78
    %v124 = vunpack.c.l.b16 %v79
    %v125 = vpack.c.b16 %v110, %v109
    %v126 = vpack.c.b16 %v112, %v111
    %v127 = vpack.c.b16 %v114, %v113
    %v128 = vpack.c.b16 %v116, %v115
    %v129 = vpack.c.b16 %v118, %v117
    %v130 = vpack.c.b16 %v120, %v119
    %v131 = vpack.c.b16 %v122, %v121
    %v132 = vpack.c.b16 %v124, %v123
    %141 = vmatprep.subr.bf16.mxu0 0
    %142 = vmatpush1.bf16.msra.mxu0 %v132
    %143 = vmatprep.subr.bf16.mxu0 0
    %144 = vmatpush1.bf16.msra.mxu0 %v131
    %145 = vmatprep.subr.bf16.mxu0 0
    %146 = vmatpush1.bf16.msra.mxu0 %v130
    %147 = vmatprep.subr.bf16.mxu0 0
    %148 = vmatpush1.bf16.msra.mxu0 %v129
    %149 = vmatprep.subr.bf16.mxu0 0
    %150 = vmatpush1.bf16.msra.mxu0 %v128
    %151 = vmatprep.subr.bf16.mxu0 0
    %152 = vmatpush1.bf16.msra.mxu0 %v127
    %153 = vmatprep.subr.bf16.mxu0 0
    %154 = vmatpush1.bf16.msra.mxu0 %v126
    %155 = vmatprep.subr.bf16.mxu0 0
    %156 = vmatpush1.bf16.msra.mxu0 %v125
    %157 = vmatprep.subr.bf16.mxu0 0
    %158 = vmatpush2.bf16.msra.mxu0 0
    %159 = vmatprep.subr.bf16.mxu0 0
    %160 = vmatpush2.bf16.msra.mxu0 0
    %161 = vmatprep.subr.bf16.mxu0 0
    %162 = vmatpush2.bf16.msra.mxu0 0
    %163 = vmatprep.subr.bf16.mxu0 0
    %164 = vmatpush2.bf16.msra.mxu0 0
    %165 = vmatprep.subr.bf16.mxu0 0
    %166 = vmatpush2.bf16.msra.mxu0 0
    %167 = vmatprep.subr.bf16.mxu0 0
    %168 = vmatpush2.bf16.msra.mxu0 0
    %169 = vmatprep.subr.bf16.mxu0 0
    %170 = vmatpush2.bf16.msra.mxu0 0
    %171 = vmatprep.subr.bf16.mxu0 0
    %172 = vmatpush2.bf16.msra.mxu0 0
    %173 = vmatprep.mubr.bf16.mxu0 0
    %174 = vmatmul.mubr.bf16.gmra.mxu0 %v91
    %v175 = vpop.f32.mrf.mxu0
    %v176 = vadd.f32 %v85, %v175
    %v177 = vpop.f32.mrf.mxu0
    %v178 = vpop.f32.mrf.mxu0
    %v179 = vadd.f32 %v85, %v178
    %v180 = vpop.f32.mrf.mxu0
    %181 = vdwg.mxu0
    %v182 = vmax.f32 %v176, 0.0
    %v183 = vmax.f32 %v179, 0.0
    %v184 = vld [vmem:[%s5] sm:$0xff]
    %v185 = vld [vmem:[%s5 + $0x8] sm:$0xff]
    %v186 = vpack.c.bf16 %v183, %v182
    %v187 = vld [vmem:[#allocation4] sm:$0xf]
    %v188 = vld [vmem:[#allocation4 + $0x4] sm:$0xf]
    %v189 = vld [vmem:[#allocation4 + $0x8] sm:$0xf]
    %v190 = vld [vmem:[#allocation4 + $0xc] sm:$0xf]
    %v191 = vld [vmem:[#allocation4 + $0x10] sm:$0xf]
    %v192 = vld [vmem:[#allocation4 + $0x14] sm:$0xf]
    %v193 = vld [vmem:[#allocation4 + $0x18] sm:$0xf]
    %v194 = vld [vmem:[#allocation4 + $0x1c] sm:$0xf]
    %v195 = vld [vmem:[#allocation4 + $0x20] sm:$0xf]
    %v196 = vld [vmem:[#allocation4 + $0x24] sm:$0xf]
    %v197 = vld [vmem:[#allocation4 + $0x28] sm:$0xf]
    %v198 = vld [vmem:[#allocation4 + $0x2c] sm:$0xf]
    %v199 = vld [vmem:[#allocation4 + $0x30] sm:$0xf]
    %v200 = vld [vmem:[#allocation4 + $0x34] sm:$0xf]
    %v201 = vld [vmem:[#allocation4 + $0x38] sm:$0xf]
    %v202 = vld [vmem:[#allocation4 + $0x3c] sm:$0xf]
    %v219 = vunpack.c.l.b16 %v187
    %v220 = vunpack.c.l.b16 %v188
    %v221 = vunpack.c.l.b16 %v189
    %v222 = vunpack.c.l.b16 %v190
    %v223 = vunpack.c.l.b16 %v191
    %v224 = vunpack.c.l.b16 %v192
    %v225 = vunpack.c.l.b16 %v193
    %v226 = vunpack.c.l.b16 %v194
    %v227 = vunpack.c.l.b16 %v195
    %v228 = vunpack.c.l.b16 %v196
    %v229 = vunpack.c.l.b16 %v197
    %v230 = vunpack.c.l.b16 %v198
    %v231 = vunpack.c.l.b16 %v199
    %v232 = vunpack.c.l.b16 %v200
    %v233 = vunpack.c.l.b16 %v201
    %v234 = vunpack.c.l.b16 %v202
    %v235 = vpack.c.b16 %v220, %v219
    %v236 = vpack.c.b16 %v222, %v221
    %v237 = vpack.c.b16 %v224, %v223
    %v238 = vpack.c.b16 %v226, %v225
    %v239 = vpack.c.b16 %v228, %v227
    %v240 = vpack.c.b16 %v230, %v229
    %v241 = vpack.c.b16 %v232, %v231
    %v242 = vpack.c.b16 %v234, %v233
    %251 = vmatprep.subr.bf16.mxu0 0
    %252 = vmatpush1.bf16.msra.mxu0 %v242
    %253 = vmatprep.subr.bf16.mxu0 0
    %254 = vmatpush1.bf16.msra.mxu0 %v241
    %255 = vmatprep.subr.bf16.mxu0 0
    %256 = vmatpush1.bf16.msra.mxu0 %v240
    %257 = vmatprep.subr.bf16.mxu0 0
    %258 = vmatpush1.bf16.msra.mxu0 %v239
    %259 = vmatprep.subr.bf16.mxu0 0
    %260 = vmatpush1.bf16.msra.mxu0 %v238
    %261 = vmatprep.subr.bf16.mxu0 0
    %262 = vmatpush1.bf16.msra.mxu0 %v237
    %263 = vmatprep.subr.bf16.mxu0 0
    %264 = vmatpush1.bf16.msra.mxu0 %v236
    %265 = vmatprep.subr.bf16.mxu0 0
    %266 = vmatpush1.bf16.msra.mxu0 %v235
    %267 = vmatprep.subr.bf16.mxu0 0
    %268 = vmatpush2.bf16.msra.mxu0 0
    %269 = vmatprep.subr.bf16.mxu0 0
    %270 = vmatpush2.bf16.msra.mxu0 0
    %271 = vmatprep.subr.bf16.mxu0 0
    %272 = vmatpush2.bf16.msra.mxu0 0
    %273 = vmatprep.subr.bf16.mxu0 0
    %274 = vmatpush2.bf16.msra.mxu0 0
    %275 = vmatprep.subr.bf16.mxu0 0
    %276 = vmatpush2.bf16.msra.mxu0 0
    %277 = vmatprep.subr.bf16.mxu0 0
    %278 = vmatpush2.bf16.msra.mxu0 0
    %279 = vmatprep.subr.bf16.mxu0 0
    %280 = vmatpush2.bf16.msra.mxu0 0
    %281 = vmatprep.subr.bf16.mxu0 0
    %282 = vmatpush2.bf16.msra.mxu0 0
    %283 = vmatprep.mubr.bf16.mxu0 0
    %284 = vmatmul.mubr.bf16.gmra.mxu0 %v186
    %v285 = vpop.f32.mrf.mxu0
    %v286 = vadd.f32 0.0, %v285
    %v287 = vpop.f32.mrf.mxu0
    %v288 = vpop.f32.mrf.mxu0
    %v289 = vadd.f32 0.0, %v288
    %v290 = vpop.f32.mrf.mxu0
    %291 = vdwg.mxu0
    %v292 = vadd.f32 %v184, %v286
    %v293 = vadd.f32 %v185, %v289
    %294 = vst [vmem:[%s5] sm:$0xff] %v292
    %295 = vst [vmem:[%s5 + $0x8] sm:$0xff] %v293
    // Predicated region
    $region34: #{feed_forward.1} parent=1 // pred_check
      _
    $region35: #{feed_forward.1} parent=1 // pred_check_branch
      %297 = sbr.rel (0) target = $region37
    $region36: #{feed_forward.1} parent=1 // pred_region
      _
    $region37: #{feed_forward.1} parent=1 // pred_fallthru
      _
    // Predicated region
    $region38: #{feed_forward.1} parent=1 // pred_check
      _
    $region39: #{feed_forward.1} parent=1 // pred_check_branch
      %299 = sbr.rel (0) target = $region41
    $region40: #{feed_forward.1} parent=1 // pred_region
      _
    $region41: #{feed_forward.1} parent=1 // pred_fallthru
      _
    %300 = vsyncpa [#allocation3], 1
    %301 = vsyncpa [#allocation5], 1

</llo_original>
